<compile_context>
chip_gen: v6e
topology: v6e:2x2x1
jax: 0.10.0
libtpu: 0.0.40
codegen_flags: <defaults>
</compile_context>

<pallas_src>
import jax
import jax.numpy as jnp
from jax import lax
from jax.experimental import pallas as pl
from jax.experimental.pallas import tpu as pltpu


def _round_up(x, m):
    return (x + m - 1) // m * m


def _fm_gather_kernel(ids_ref, tab_ref, u_ref, i_ref):
    """One grid step: fused one-hot MXU gather for a (user, item) batch tile.

    ids_ref : (2*TB, 1) int32  — rows [0,TB) user ids, rows [TB,2TB) item ids
                                  already offset by num_users.
    tab_ref : (NU+NI, E) f32   — row-wise concatenated embedding tables
                                  (constant block index => fetched once).
    u_ref   : (TB, E)          — user embeddings for this tile.
    i_ref   : (TB, E)          — item embeddings for this tile.
    """
    tb2 = ids_ref.shape[0]          # 2 * TB
    n = tab_ref.shape[0]            # NU + NI
    tb = tb2 // 2

    # (2*TB, 1) ids vs (2*TB, N) iota -> single one-hot selection matrix.
    onehot = (ids_ref[...] == lax.broadcasted_iota(jnp.int32, (tb2, n), 1)
              ).astype(tab_ref.dtype)

    # Single block-diagonal-equivalent MXU matmul for both lookups.
    emb = jnp.dot(onehot, tab_ref[...], preferred_element_type=jnp.float32)

    # Split along sublanes (TB is a multiple of 8) into the two outputs.
    u_ref[...] = emb[:tb, :].astype(u_ref.dtype)
    i_ref[...] = emb[tb:, :].astype(i_ref.dtype)


def fm_model_forward(user_ids, item_ids, user_emb_table, item_emb_table):
    """Pallas implementation of FMModel.forward.

    Args:
      user_ids:  int[B]
      item_ids:  int[B]
      user_emb_table: float32[num_users, E]
      item_emb_table: float32[num_items, E]
    Returns:
      (float32[B, E], float32[B, E])
    """
    B = user_ids.shape[0]
    NU, E = user_emb_table.shape
    NI, Ei = item_emb_table.shape
    assert Ei == E
    N = NU + NI

    # Batch tile: whole (sublane-padded) batch when small; <=128 rows per step
    # so batches >= 256 give >= 2 "parallel" grid steps (v7x 2 TensorCores)
    # and the per-step one-hot stays small.
    TB = min(_round_up(max(B, 1), 8), 128)
    Bp = _round_up(B, TB)
    nt = Bp // TB

    uids = user_ids.astype(jnp.int32)
    iids = item_ids.astype(jnp.int32)
    if Bp != B:
        # Padded rows gather (valid) row 0 and are sliced off afterwards.
        uids = jnp.pad(uids, (0, Bp - B))
        iids = jnp.pad(iids, (0, Bp - B))
    iids = iids + NU  # offset into the concatenated table

    # Tile-interleaved packing: grid step b reads rows [b*2TB, (b+1)*2TB):
    # first TB rows are user ids of tile b, next TB rows are item ids.
    ids = jnp.concatenate(
        [uids.reshape(nt, TB), iids.reshape(nt, TB)], axis=1
    ).reshape(nt * 2 * TB, 1)

    # Row-wise concatenated table, VMEM-resident inside the kernel.
    table = jnp.concatenate([user_emb_table, item_emb_table], axis=0)

    out_dtype = user_emb_table.dtype
    itemsize = jnp.dtype(out_dtype).itemsize
    flops = 2 * (2 * Bp) * N * E                     # one-hot matmul
    bytes_accessed = (N * E * itemsize               # table (read once)
                      + 2 * Bp * 4                   # packed ids
                      + 2 * Bp * E * itemsize)       # the two outputs

    grid_spec = pltpu.PrefetchScalarGridSpec(
        num_scalar_prefetch=0,
        grid=(nt,),
        in_specs=[
            # Packed (user, item) id tile: one descriptor per step.
            pl.BlockSpec((2 * TB, 1), lambda b: (b, 0)),
            # Whole concatenated table resident in VMEM (constant block index
            # => fetched once across all grid steps).
            pl.BlockSpec((N, E), lambda b: (0, 0)),
        ],
        out_specs=[
            pl.BlockSpec((TB, E), lambda b: (b, 0)),   # user embeddings
            pl.BlockSpec((TB, E), lambda b: (b, 0)),   # item embeddings
        ],
    )

    u_out, i_out = pl.pallas_call(
        _fm_gather_kernel,
        grid_spec=grid_spec,
        out_shape=(jax.ShapeDtypeStruct((Bp, E), out_dtype),
                   jax.ShapeDtypeStruct((Bp, E), out_dtype)),
        compiler_params=pltpu.CompilerParams(
            dimension_semantics=("parallel",),   # independent batch tiles
        ),
        cost_estimate=pl.CostEstimate(
            flops=flops, transcendentals=0, bytes_accessed=bytes_accessed),
    )(ids, table)

    if Bp != B:
        u_out = u_out[:B]
        i_out = i_out[:B]
    return u_out, i_out


if __name__ == "__main__":
    # Deterministic parameter / input construction (synthetic, no checkpoint).
    num_users = 64
    num_items = 48
    id_emb_size = 32
    batch = 8

    key = jax.random.PRNGKey(0)
    k_u, k_i, k_uid, k_iid = jax.random.split(key, 4)

    # nn.init.normal_(weight, mean=0.0, std=0.1)
    user_emb_table = 0.1 * jax.random.normal(k_u, (num_users, id_emb_size), jnp.float32)
    item_emb_table = 0.1 * jax.random.normal(k_i, (num_items, id_emb_size), jnp.float32)

    user_ids = jax.random.randint(k_uid, (batch,), 0, num_users, dtype=jnp.int32)
    item_ids = jax.random.randint(k_iid, (batch,), 0, num_items, dtype=jnp.int32)

    fwd = jax.jit(fm_model_forward)
    u_out, i_out = fwd(user_ids, item_ids, user_emb_table, item_emb_table)
    jax.block_until_ready((u_out, i_out))

    # Reference check against plain-JAX gather (== torch embedding lookup).
    u_ref = user_emb_table[user_ids]
    i_ref = item_emb_table[item_ids]
    assert u_out.shape == (batch, id_emb_size) and i_out.shape == (batch, id_emb_size)
    assert jnp.allclose(u_out, u_ref) and jnp.allclose(i_out, i_ref)

    print("KERNEL_OK")
</pallas_src>

<mosaic_0001>
module attributes {stable_mosaic.version = 11 : i64} {
  func.func @_fm_gather_kernel(%arg0: i32, %arg1: memref<16x1xi32, #tpu.memory_space<vmem>>, %arg2: memref<112x32xf32, #tpu.memory_space<vmem>>, %arg3: memref<8x32xf32, #tpu.memory_space<vmem>>, %arg4: memref<8x32xf32, #tpu.memory_space<vmem>>) attributes {dimension_semantics = [#tpu.dimension_semantics<parallel>], iteration_bounds = array<i64: 1>, scalar_prefetch = 0 : i64, scratch_operands = 0 : i64, tpu.core_type = #tpu.core_type<tc>, window_params = [{transform_indices = @transform_0, window_bounds = array<i64: 16, 1>}, {pipeline_mode = #tpu.pipeline_mode<synchronous>, transform_indices = @transform_1, window_bounds = array<i64: 112, 32>}, {transform_indices = @transform_2, window_bounds = array<i64: 8, 32>}, {transform_indices = @transform_3, window_bounds = array<i64: 8, 32>}]} {
    %c0 = arith.constant 0 : index
    %c0_0 = arith.constant 0 : index
    %0 = vector.load %arg1[%c0, %c0_0] : memref<16x1xi32, #tpu.memory_space<vmem>>, vector<16x1xi32>
    %1 = tpu.iota {dimensions = array<i32: 1>} : vector<16x112xi32>
    %2 = vector.broadcast %0 : vector<16x1xi32> to vector<16x112xi32>
    %3 = arith.cmpi eq, %2, %1 : vector<16x112xi32>
    %4 = arith.extui %3 : vector<16x112xi1> to vector<16x112xi32>
    %5 = arith.sitofp %4 : vector<16x112xi32> to vector<16x112xf32>
    %c0_1 = arith.constant 0 : index
    %c0_2 = arith.constant 0 : index
    %6 = vector.load %arg2[%c0_1, %c0_2] : memref<112x32xf32, #tpu.memory_space<vmem>>, vector<112x32xf32>
    %cst = arith.constant dense<0.000000e+00> : vector<16x32xf32>
    %7 = tpu.matmul %5, %6, %cst {dimension_numbers = #tpu.dot_dimension_numbers<[1], [0], [0], [1], [0, 0, 1, 1], [], []>} : vector<16x112xf32>, vector<112x32xf32>, vector<16x32xf32> -> vector<16x32xf32>
    %8 = vector.extract_strided_slice %7 {offsets = [0, 0], sizes = [8, 32], strides = [1, 1]} : vector<16x32xf32> to vector<8x32xf32>
    %c0_3 = arith.constant 0 : index
    %c0_4 = arith.constant 0 : index
    %9 = vector.load %arg3[%c0_3, %c0_4] : memref<8x32xf32, #tpu.memory_space<vmem>>, vector<8x32xf32>
    tpu.vector_store %arg3[%c0_3, %c0_4], %8 {strides = array<i32>} : memref<8x32xf32, #tpu.memory_space<vmem>>, vector<8x32xf32>,
    %10 = vector.extract_strided_slice %7 {offsets = [8, 0], sizes = [8, 32], strides = [1, 1]} : vector<16x32xf32> to vector<8x32xf32>
    %c0_5 = arith.constant 0 : index
    %c0_6 = arith.constant 0 : index
    %11 = vector.load %arg4[%c0_5, %c0_6] : memref<8x32xf32, #tpu.memory_space<vmem>>, vector<8x32xf32>
    tpu.vector_store %arg4[%c0_5, %c0_6], %10 {strides = array<i32>} : memref<8x32xf32, #tpu.memory_space<vmem>>, vector<8x32xf32>,
    return
  }
  func.func @transform_0(%arg0: i32) -> (i32, i32) {
    %c0_i32 = arith.constant 0 : i32
    %c0_i32_0 = arith.constant 0 : i32
    return %arg0, %c0_i32 : i32, i32
  }
  func.func @transform_1(%arg0: i32) -> (i32, i32) {
    %c0_i32 = arith.constant 0 : i32
    %c0_i32_0 = arith.constant 0 : i32
    %c0_i32_1 = arith.constant 0 : i32
    return %c0_i32, %c0_i32_0 : i32, i32
  }
  func.func @transform_2(%arg0: i32) -> (i32, i32) {
    %c0_i32 = arith.constant 0 : i32
    %c0_i32_0 = arith.constant 0 : i32
    return %arg0, %c0_i32 : i32, i32
  }
  func.func @transform_3(%arg0: i32) -> (i32, i32) {
    %c0_i32 = arith.constant 0 : i32
    %c0_i32_0 = arith.constant 0 : i32
    return %arg0, %c0_i32 : i32, i32
  }
}

</mosaic_0001>

<llo_original>
// kernel: fm_model_forward.1
$region0: #{fm_model_forward.1}
  #allocation0 [shape = 'u32[]', space=smem, size = 0x4, offset = 0x4, fixed_abs, tag = 'smem constant byte address 0x4 - core index']
  #allocation1 [shape = 'u32[144,128]{1,0:T(1,128)}', space=vmem, size = 0x12000, scoped, tag = 'internal scratch']
  %s0 = inlined_call_operand.vmem [shape: s32[16,1], index: 0, kind: input, shape index: {}]
  %s1 = inlined_call_operand.vmem [shape: f32[112,32], index: 1, kind: input, shape index: {}]
  %s2 = inlined_call_operand.hbm [shape: f32[8,32], index: 2, kind: output, shape index: {0}]
  %s3 = inlined_call_operand.hbm [shape: f32[8,32], index: 3, kind: output, shape index: {1}]
  %4 = xla_tuple %s2, %s3
  %s5 = sld [smem:[#allocation0]]
  $region26: #{fm_model_forward.1} parent=0
    _
  %s7 = ssub.s32 1, %s5
  %s8 = scalar_select 0, %s7, %s5
  $region1: #{fm_model_forward.1} parent=0
    #allocation2 [shape = 'u8[4096]{0}', space=vmem, size = 0x1000, scoped, tag = 'output window, operand 0, single buffered']
    #allocation3 [shape = 's32[1]{0}', space=sflag, size = 0x4, scoped, tag = 'scoped memory for fm_model_forward.1']
    #allocation4 [shape = 'u8[4096]{0}', space=vmem, size = 0x1000, scoped, tag = 'output window, operand 1, single buffered']
    #allocation5 [shape = 's32[1]{0}', space=sflag, size = 0x4, scoped, tag = 'scoped memory for fm_model_forward.1']
    %9 = vsyncpa [#allocation3], 0
    %10 = vsyncpa [#allocation5], 0
    // Predicated region
    $region2: #{fm_model_forward.1} parent=1 // pred_check
      _
    $region3: #{fm_model_forward.1} parent=1 // pred_check_branch
      %12 = sbr.rel (0) target = $region5
    $region4: #{fm_model_forward.1} parent=1 // pred_region
      _
    $region5: #{fm_model_forward.1} parent=1 // pred_fallthru
      _
    // Predicated region
    $region6: #{fm_model_forward.1} parent=1 // pred_check
      _
    $region7: #{fm_model_forward.1} parent=1 // pred_check_branch
      %14 = sbr.rel (0) target = $region9
    $region8: #{fm_model_forward.1} parent=1 // pred_region
      _
    $region9: #{fm_model_forward.1} parent=1 // pred_fallthru
      _
    %v15 = vld [vmem:[%s0] sm:$0xff]
    %v16 = vld [vmem:[%s0 + $0x8] sm:$0xff]
    %v17 = vlaneseq
    %v18 = vand.u32 %v17, 127
    %19 = vset.pattern.permute.xlu0 0
    %20 = vperm.xlu0 %19, %v15
    %v21 = vpop.permute.xlu0 %20
    %22 = vset.pattern.permute.xlu0 0
    %23 = vperm.xlu0 %22, %v16
    %v24 = vpop.permute.xlu0 %23
    %vm25 = vcmp.eq.s32.totalorder %v21, %v18
    %vm26 = vcmp.eq.s32.totalorder %v24, %v18
    %v27 = vsel %vm25, 1, 0
    %v28 = vsel %vm26, 1, 0
    %v29 = vcvt.s32.f32 %v27
    %v30 = vcvt.s32.f32 %v28
    %v31 = vld [vmem:[%s1] sm:$0xff]
    %v32 = vld [vmem:[%s1 + $0x8] sm:$0xff]
    %v33 = vld [vmem:[%s1 + $0x10] sm:$0xff]
    %v34 = vld [vmem:[%s1 + $0x18] sm:$0xff]
    %v35 = vld [vmem:[%s1 + $0x20] sm:$0xff]
    %v36 = vld [vmem:[%s1 + $0x28] sm:$0xff]
    %v37 = vld [vmem:[%s1 + $0x30] sm:$0xff]
    %v38 = vld [vmem:[%s1 + $0x38] sm:$0xff]
    %v39 = vld [vmem:[%s1 + $0x40] sm:$0xff]
    %v40 = vld [vmem:[%s1 + $0x48] sm:$0xff]
    %v41 = vld [vmem:[%s1 + $0x50] sm:$0xff]
    %v42 = vld [vmem:[%s1 + $0x58] sm:$0xff]
    %v43 = vld [vmem:[%s1 + $0x60] sm:$0xff]
    %v44 = vld [vmem:[%s1 + $0x68] sm:$0xff]
    %vm45 = vcmask 916480
    %v47 = vsel %vm45, %v29, 0
    %v50 = vsel %vm45, %v30, 0
    %52 = vmatprep.subr.mxu0 0.0
    %53 = vmatpush1.msra.mxu0 0.0
    %54 = vmatprep.subr.mxu0 0.0
    %55 = vmatpush1.msra.mxu0 0.0
    %56 = vmatprep.subr.mxu0 0.0
    %57 = vmatpush1.msra.mxu0 %v44
    %58 = vmatprep.subr.mxu0 0.0
    %59 = vmatpush1.msra.mxu0 %v43
    %60 = vmatprep.subr.mxu0 0.0
    %61 = vmatpush1.msra.mxu0 %v42
    %62 = vmatprep.subr.mxu0 0.0
    %63 = vmatpush1.msra.mxu0 %v41
    %64 = vmatprep.subr.mxu0 0.0
    %65 = vmatpush1.msra.mxu0 %v40
    %66 = vmatprep.subr.mxu0 0.0
    %67 = vmatpush1.msra.mxu0 %v39
    %68 = vmatprep.subr.mxu0 0.0
    %69 = vmatpush1.msra.mxu0 %v38
    %70 = vmatprep.subr.mxu0 0.0
    %71 = vmatpush1.msra.mxu0 %v37
    %72 = vmatprep.subr.mxu0 0.0
    %73 = vmatpush1.msra.mxu0 %v36
    %74 = vmatprep.subr.mxu0 0.0
    %75 = vmatpush1.msra.mxu0 %v35
    %76 = vmatprep.subr.mxu0 0.0
    %77 = vmatpush1.msra.mxu0 %v34
    %78 = vmatprep.subr.mxu0 0.0
    %79 = vmatpush1.msra.mxu0 %v33
    %80 = vmatprep.subr.mxu0 0.0
    %81 = vmatpush1.msra.mxu0 %v32
    %82 = vmatprep.subr.mxu0 0.0
    %83 = vmatpush1.msra.mxu0 %v31
    %84 = vmatprep.subr.mxu0 0.0
    %85 = vmatpush2.msra.mxu0 0.0
    %86 = vmatprep.subr.mxu0 0.0
    %87 = vmatpush2.msra.mxu0 0.0
    %88 = vmatprep.subr.mxu0 0.0
    %89 = vmatpush2.msra.mxu0 0.0
    %90 = vmatprep.subr.mxu0 0.0
    %91 = vmatpush2.msra.mxu0 0.0
    %92 = vmatprep.subr.mxu0 0.0
    %93 = vmatpush2.msra.mxu0 0.0
    %94 = vmatprep.subr.mxu0 0.0
    %95 = vmatpush2.msra.mxu0 0.0
    %96 = vmatprep.subr.mxu0 0.0
    %97 = vmatpush2.msra.mxu0 0.0
    %98 = vmatprep.subr.mxu0 0.0
    %99 = vmatpush2.msra.mxu0 0.0
    %100 = vmatprep.subr.mxu0 0.0
    %101 = vmatpush2.msra.mxu0 0.0
    %102 = vmatprep.subr.mxu0 0.0
    %103 = vmatpush2.msra.mxu0 0.0
    %104 = vmatprep.subr.mxu0 0.0
    %105 = vmatpush2.msra.mxu0 0.0
    %106 = vmatprep.subr.mxu0 0.0
    %107 = vmatpush2.msra.mxu0 0.0
    %108 = vmatprep.subr.mxu0 0.0
    %109 = vmatpush2.msra.mxu0 0.0
    %110 = vmatprep.subr.mxu0 0.0
    %111 = vmatpush2.msra.mxu0 0.0
    %112 = vmatprep.subr.mxu0 0.0
    %113 = vmatpush2.msra.mxu0 0.0
    %114 = vmatprep.subr.mxu0 0.0
    %115 = vmatpush2.msra.mxu0 0.0
    %116 = vmatprep.mubr.f32.mxu0 0.0
    %117 = vmatmul.mubr.f32.gmra.mxu0 %v47
    %v118 = vpop.f32.mrf.mxu0
    %v119 = vadd.f32 0.0, %v118
    %v120 = vpop.f32.mrf.mxu0
    %121 = vmatprep.mubr.f32.mxu0 0.0
    %122 = vmatmul.mubr.f32.gmra.mxu0 %v50
    %v123 = vpop.f32.mrf.mxu0
    %v124 = vadd.f32 0.0, %v123
    %v125 = vpop.f32.mrf.mxu0
    %126 = vdwg.mxu0
    %vm127 = vcmask 261120
    %128 = vst.msk [vmem:[#allocation2] sm:$0xff] %vm127, %v119
    %129 = vst.msk [vmem:[#allocation4] sm:$0xff] %vm127, %v124
    // Predicated region
    $region10: #{fm_model_forward.1} parent=1 // pred_check
      _
    $region11: #{fm_model_forward.1} parent=1 // pred_check_branch
      %131 = sbr.rel (0) target = $region13
    $region12: #{fm_model_forward.1} parent=1 // pred_region
      %s133 = ssub.s32 128, 128
      %134 = vsyncadd [#allocation3], %s133
      %s136 = sshll.u32 [#allocation2], 4
      %s137 = int_to_ptr.vmem [resolvable:$true] %s136
      %139 = dma.vmem_to_hbm [thread:$0]  %s137, 128, %s2, [#allocation3]
    $region13: #{fm_model_forward.1} parent=1 // pred_fallthru
      _
    // Predicated region
    $region14: #{fm_model_forward.1} parent=1 // pred_check
      _
    $region15: #{fm_model_forward.1} parent=1 // pred_check_branch
      %141 = sbr.rel (0) target = $region17
    $region16: #{fm_model_forward.1} parent=1 // pred_region
      %s143 = ssub.s32 128, 128
      %144 = vsyncadd [#allocation5], %s143
      %s146 = sshll.u32 [#allocation4], 4
      %s147 = int_to_ptr.vmem [resolvable:$true] %s146
      %149 = dma.vmem_to_hbm [thread:$0]  %s147, 128, %s3, [#allocation5]
    $region17: #{fm_model_forward.1} parent=1 // pred_fallthru
      _
    // Predicated region
    $region18: #{fm_model_forward.1} parent=1 // pred_check
      _
    $region19: #{fm_model_forward.1} parent=1 // pred_check_branch
      %151 = sbr.rel (0) target = $region21
    $region20: #{fm_model_forward.1} parent=1 // pred_region
      %152 = dma.done [#allocation3], 128
    $region21: #{fm_model_forward.1} parent=1 // pred_fallthru
      _
    // Predicated region
    $region22: #{fm_model_forward.1} parent=1 // pred_check
      _
    $region23: #{fm_model_forward.1} parent=1 // pred_check_branch
      %154 = sbr.rel (0) target = $region25
    $region24: #{fm_model_forward.1} parent=1 // pred_region
      %155 = dma.done [#allocation5], 128
    $region25: #{fm_model_forward.1} parent=1 // pred_fallthru
      _
    %156 = vsyncpa [#allocation3], 1
    %157 = vsyncpa [#allocation5], 1

</llo_original>
